<compile_context>
chip_gen: v5e
topology: v5e:2x2
jax: 0.10.0
libtpu: 0.0.40
codegen_flags: <defaults>
</compile_context>

<pallas_src>
import jax
import jax.numpy as jnp
from jax.experimental import pallas as pl
from jax.experimental.pallas import tpu as pltpu

HIDDEN_SIZE = 16
INPUT_SIZE = 1
NUM_LAYERS = 2   # hard-wired to 2 stacked RNN layers (matches num_layers=2)
OUTPUT_SIZE = 1


def rnn_kernel(x_ref, p_ref, out_ref):
    """Whole-sequence 2-layer Elman RNN + FC head, all resident in VMEM.

    x_ref:   (T*B, 1)      time-major, flattened: row t*B+b is x[b, t, 0]
    p_ref:   (3H+5, H)     packed parameter slab:
               rows 0   : H    -> W_hh_l0^T          (H, H)
               rows H   : 2H   -> W_ih_l1^T          (H, H)
               rows 2H  : 3H   -> W_hh_l1^T          (H, H)
               row  3H         -> W_ih_l0^T          (1, H)   (INPUT_SIZE == 1)
               row  3H+1       -> b_ih_l0 + b_hh_l0  (1, H)
               row  3H+2       -> b_ih_l1 + b_hh_l1  (1, H)
               row  3H+3       -> W_fc               (1, H)   (OUTPUT_SIZE == 1)
               row  3H+4       -> b_fc broadcast     (1, H)
    out_ref: (B, 1)
    """
    H = p_ref.shape[1]
    B = out_ref.shape[0]
    T = x_ref.shape[0] // B

    # ---- One VMEM load of the slab; all static slices are hoisted, one-time. ----
    p = p_ref[...]                                   # (3H+5, H)
    whh0 = p[0:H, :]                                 # (H, H)
    wih1 = p[H:2 * H, :]                             # (H, H)
    whh1 = p[2 * H:3 * H, :]                         # (H, H)
    wih0_row = p[3 * H:3 * H + 1, :]                 # (1, H)
    b0 = p[3 * H + 1:3 * H + 2, :]                   # (1, H)
    b1 = jnp.broadcast_to(p[3 * H + 2:3 * H + 3, :], (B, H))   # hoisted broadcast
    wfc_row = p[3 * H + 3:3 * H + 4, :]              # (1, H)
    bfc = p[3 * H + 4:3 * H + 5, 0:1]                # (1, 1)

    # ---- Layer-0 input projection hoisted out of the recurrence (INPUT_SIZE==1:
    #      one dense (T*B, H) VPU broadcast-multiply, no K=1 matmuls). ----
    xproj = x_ref[...] * wih0_row + b0               # (T*B, H)

    h0 = jnp.zeros((B, H), jnp.float32)              # torch h0 = zeros
    h1 = jnp.zeros((B, H), jnp.float32)

    # ---- Fully unrolled time recurrence (T static). Per step only two MXU
    #      dots sit on the dependence chain; the h1_prev @ W_hh_l1 product is
    #      issued first so it overlaps the layer-0 dot/tanh of the same step. ----
    for t in range(T):
        acc1 = jnp.dot(h1, whh1, preferred_element_type=jnp.float32) + b1
        h0 = jnp.tanh(
            xproj[t * B:(t + 1) * B, :]
            + jnp.dot(h0, whh0, preferred_element_type=jnp.float32))
        h1 = jnp.tanh(
            jnp.dot(h0, wih1, preferred_element_type=jnp.float32) + acc1)

    # ---- FC head on the VPU/XLU (N=1 matmul would waste the MXU). ----
    out_ref[...] = jnp.sum(h1 * wfc_row, axis=-1, keepdims=True) + bfc


def simple_rnn_forward(x, params):
    """x: (B, T, INPUT_SIZE) float32 (batch_first, like the PyTorch module)."""
    B, T, _ = x.shape
    H, O = HIDDEN_SIZE, OUTPUT_SIZE

    # Time-major, flattened to (T*B, 1): row t*B + b  <->  x[b, t, 0].
    x_flat = jnp.transpose(x, (1, 0, 2)).reshape(T * B, INPUT_SIZE)
    x_flat = x_flat.astype(jnp.float32)

    # Pack all parameters into one (3H+5, H) slab -> 2 kernel operands total.
    slab = jnp.concatenate(
        [
            params["w_hh_l0"].T,                                   # rows 0:H
            params["w_ih_l1"].T,                                   # rows H:2H
            params["w_hh_l1"].T,                                   # rows 2H:3H
            params["w_ih_l0"].T,                                   # row 3H
            (params["b_ih_l0"] + params["b_hh_l0"]).reshape(1, H), # row 3H+1
            (params["b_ih_l1"] + params["b_hh_l1"]).reshape(1, H), # row 3H+2
            params["w_fc"],                                        # row 3H+3
            jnp.broadcast_to(params["b_fc"].reshape(1, 1), (1, H)),# row 3H+4
        ],
        axis=0,
    ).astype(jnp.float32)                                          # (3H+5, H)

    # Advisory cost hint so XLA schedules around this latency-bound call.
    flops = 6 * T * B * H * H + 2 * T * B * H + 2 * B * H
    transcendentals = 2 * T * B * H
    bytes_accessed = 4 * (T * B * INPUT_SIZE + (3 * H + 5) * H + B * O)

    vmem = pl.BlockSpec(memory_space=pltpu.MemorySpace.VMEM)
    return pl.pallas_call(
        rnn_kernel,
        out_shape=jax.ShapeDtypeStruct((B, O), jnp.float32),
        in_specs=[vmem, vmem],
        out_specs=vmem,
        cost_estimate=pl.CostEstimate(flops=flops,
                                      transcendentals=transcendentals,
                                      bytes_accessed=bytes_accessed),
    )(x_flat, slab)


def simple_rnn_reference(x, params):
    """Pure-JAX reference matching torch.nn.RNN (tanh) + Linear semantics."""
    B, T, _ = x.shape
    h0 = jnp.zeros((B, HIDDEN_SIZE), jnp.float32)
    h1 = jnp.zeros((B, HIDDEN_SIZE), jnp.float32)
    for t in range(T):
        x_t = x[:, t, :]
        h0 = jnp.tanh(x_t @ params["w_ih_l0"].T + params["b_ih_l0"]
                      + h0 @ params["w_hh_l0"].T + params["b_hh_l0"])
        h1 = jnp.tanh(h0 @ params["w_ih_l1"].T + params["b_ih_l1"]
                      + h1 @ params["w_hh_l1"].T + params["b_hh_l1"])
    return h1 @ params["w_fc"].T + params["b_fc"]


def init_params(key):
    """Deterministic init mimicking PyTorch's U(-1/sqrt(H), 1/sqrt(H))."""
    k = 1.0 / jnp.sqrt(jnp.float32(HIDDEN_SIZE))
    keys = jax.random.split(key, 10)
    u = lambda kk, shape: jax.random.uniform(kk, shape, jnp.float32, -k, k)
    return {
        "w_ih_l0": u(keys[0], (HIDDEN_SIZE, INPUT_SIZE)),
        "w_hh_l0": u(keys[1], (HIDDEN_SIZE, HIDDEN_SIZE)),
        "b_ih_l0": u(keys[2], (HIDDEN_SIZE,)),
        "b_hh_l0": u(keys[3], (HIDDEN_SIZE,)),
        "w_ih_l1": u(keys[4], (HIDDEN_SIZE, HIDDEN_SIZE)),
        "w_hh_l1": u(keys[5], (HIDDEN_SIZE, HIDDEN_SIZE)),
        "b_ih_l1": u(keys[6], (HIDDEN_SIZE,)),
        "b_hh_l1": u(keys[7], (HIDDEN_SIZE,)),
        "w_fc":    u(keys[8], (OUTPUT_SIZE, HIDDEN_SIZE)),
        "b_fc":    u(keys[9], (OUTPUT_SIZE,)),
    }


if __name__ == "__main__":
    key = jax.random.PRNGKey(0)
    k_param, k_x = jax.random.split(key)

    params = init_params(k_param)
    B, T = 2, 8
    x = jax.random.normal(k_x, (B, T, INPUT_SIZE), jnp.float32)

    out = simple_rnn_forward(x, params)
    out = jax.block_until_ready(out)

    ref = simple_rnn_reference(x, params)
    assert out.shape == (B, OUTPUT_SIZE)
    assert jnp.allclose(out, ref, atol=1e-5, rtol=1e-5), (out, ref)

    print("KERNEL_OK")
</pallas_src>

<mosaic_0001>
module attributes {stable_mosaic.version = 11 : i64} {
  func.func @rnn_kernel(%arg0: memref<16x1xf32, #tpu.memory_space<vmem>>, %arg1: memref<53x16xf32, #tpu.memory_space<vmem>>, %arg2: memref<2x1xf32, #tpu.memory_space<vmem>>) attributes {dimension_semantics = [], scalar_prefetch = 0 : i64, scratch_operands = 0 : i64, tpu.core_type = #tpu.core_type<tc>} {
    %c0 = arith.constant 0 : index
    %c0_0 = arith.constant 0 : index
    %0 = vector.load %arg1[%c0, %c0_0] : memref<53x16xf32, #tpu.memory_space<vmem>>, vector<53x16xf32>
    %1 = vector.extract_strided_slice %0 {offsets = [0, 0], sizes = [16, 16], strides = [1, 1]} : vector<53x16xf32> to vector<16x16xf32>
    %2 = vector.extract_strided_slice %0 {offsets = [16, 0], sizes = [16, 16], strides = [1, 1]} : vector<53x16xf32> to vector<16x16xf32>
    %3 = vector.extract_strided_slice %0 {offsets = [32, 0], sizes = [16, 16], strides = [1, 1]} : vector<53x16xf32> to vector<16x16xf32>
    %4 = vector.extract_strided_slice %0 {offsets = [48, 0], sizes = [1, 16], strides = [1, 1]} : vector<53x16xf32> to vector<1x16xf32>
    %5 = vector.extract_strided_slice %0 {offsets = [49, 0], sizes = [1, 16], strides = [1, 1]} : vector<53x16xf32> to vector<1x16xf32>
    %6 = vector.extract_strided_slice %0 {offsets = [50, 0], sizes = [1, 16], strides = [1, 1]} : vector<53x16xf32> to vector<1x16xf32>
    %7 = vector.shape_cast %6 : vector<1x16xf32> to vector<1x16xf32>
    %8 = vector.broadcast %7 : vector<1x16xf32> to vector<2x16xf32>
    %9 = vector.extract_strided_slice %0 {offsets = [51, 0], sizes = [1, 16], strides = [1, 1]} : vector<53x16xf32> to vector<1x16xf32>
    %10 = vector.extract_strided_slice %0 {offsets = [52, 0], sizes = [1, 1], strides = [1, 1]} : vector<53x16xf32> to vector<1x1xf32>
    %c0_1 = arith.constant 0 : index
    %c0_2 = arith.constant 0 : index
    %11 = vector.load %arg0[%c0_1, %c0_2] : memref<16x1xf32, #tpu.memory_space<vmem>>, vector<16x1xf32>
    %12 = vector.broadcast %11 : vector<16x1xf32> to vector<16x16xf32>
    %13 = vector.broadcast %4 : vector<1x16xf32> to vector<16x16xf32>
    %14 = arith.mulf %12, %13 : vector<16x16xf32>
    %15 = vector.broadcast %5 : vector<1x16xf32> to vector<16x16xf32>
    %16 = arith.addf %14, %15 : vector<16x16xf32>
    %cst = arith.constant 0.000000e+00 : f32
    %17 = vector.broadcast %cst : f32 to vector<2x16xf32>
    %cst_3 = arith.constant 0.000000e+00 : f32
    %18 = vector.broadcast %cst_3 : f32 to vector<2x16xf32>
    %cst_4 = arith.constant dense<0.000000e+00> : vector<2x16xf32>
    %19 = tpu.matmul %18, %3, %cst_4 {dimension_numbers = #tpu.dot_dimension_numbers<[1], [0], [0], [1], [0, 0, 1, 1], [], []>} : vector<2x16xf32>, vector<16x16xf32>, vector<2x16xf32> -> vector<2x16xf32>
    %20 = arith.addf %19, %8 : vector<2x16xf32>
    %21 = vector.extract_strided_slice %16 {offsets = [0, 0], sizes = [2, 16], strides = [1, 1]} : vector<16x16xf32> to vector<2x16xf32>
    %cst_5 = arith.constant dense<0.000000e+00> : vector<2x16xf32>
    %22 = tpu.matmul %17, %1, %cst_5 {dimension_numbers = #tpu.dot_dimension_numbers<[1], [0], [0], [1], [0, 0, 1, 1], [], []>} : vector<2x16xf32>, vector<16x16xf32>, vector<2x16xf32> -> vector<2x16xf32>
    %23 = arith.addf %21, %22 : vector<2x16xf32>
    %24 = math.tanh %23 : vector<2x16xf32>
    %cst_6 = arith.constant dense<0.000000e+00> : vector<2x16xf32>
    %25 = tpu.matmul %24, %2, %cst_6 {dimension_numbers = #tpu.dot_dimension_numbers<[1], [0], [0], [1], [0, 0, 1, 1], [], []>} : vector<2x16xf32>, vector<16x16xf32>, vector<2x16xf32> -> vector<2x16xf32>
    %26 = arith.addf %25, %20 : vector<2x16xf32>
    %27 = math.tanh %26 : vector<2x16xf32>
    %cst_7 = arith.constant dense<0.000000e+00> : vector<2x16xf32>
    %28 = tpu.matmul %27, %3, %cst_7 {dimension_numbers = #tpu.dot_dimension_numbers<[1], [0], [0], [1], [0, 0, 1, 1], [], []>} : vector<2x16xf32>, vector<16x16xf32>, vector<2x16xf32> -> vector<2x16xf32>
    %29 = arith.addf %28, %8 : vector<2x16xf32>
    %30 = vector.extract_strided_slice %16 {offsets = [2, 0], sizes = [2, 16], strides = [1, 1]} : vector<16x16xf32> to vector<2x16xf32>
    %cst_8 = arith.constant dense<0.000000e+00> : vector<2x16xf32>
    %31 = tpu.matmul %24, %1, %cst_8 {dimension_numbers = #tpu.dot_dimension_numbers<[1], [0], [0], [1], [0, 0, 1, 1], [], []>} : vector<2x16xf32>, vector<16x16xf32>, vector<2x16xf32> -> vector<2x16xf32>
    %32 = arith.addf %30, %31 : vector<2x16xf32>
    %33 = math.tanh %32 : vector<2x16xf32>
    %cst_9 = arith.constant dense<0.000000e+00> : vector<2x16xf32>
    %34 = tpu.matmul %33, %2, %cst_9 {dimension_numbers = #tpu.dot_dimension_numbers<[1], [0], [0], [1], [0, 0, 1, 1], [], []>} : vector<2x16xf32>, vector<16x16xf32>, vector<2x16xf32> -> vector<2x16xf32>
    %35 = arith.addf %34, %29 : vector<2x16xf32>
    %36 = math.tanh %35 : vector<2x16xf32>
    %cst_10 = arith.constant dense<0.000000e+00> : vector<2x16xf32>
    %37 = tpu.matmul %36, %3, %cst_10 {dimension_numbers = #tpu.dot_dimension_numbers<[1], [0], [0], [1], [0, 0, 1, 1], [], []>} : vector<2x16xf32>, vector<16x16xf32>, vector<2x16xf32> -> vector<2x16xf32>
    %38 = arith.addf %37, %8 : vector<2x16xf32>
    %39 = vector.extract_strided_slice %16 {offsets = [4, 0], sizes = [2, 16], strides = [1, 1]} : vector<16x16xf32> to vector<2x16xf32>
    %cst_11 = arith.constant dense<0.000000e+00> : vector<2x16xf32>
    %40 = tpu.matmul %33, %1, %cst_11 {dimension_numbers = #tpu.dot_dimension_numbers<[1], [0], [0], [1], [0, 0, 1, 1], [], []>} : vector<2x16xf32>, vector<16x16xf32>, vector<2x16xf32> -> vector<2x16xf32>
    %41 = arith.addf %39, %40 : vector<2x16xf32>
    %42 = math.tanh %41 : vector<2x16xf32>
    %cst_12 = arith.constant dense<0.000000e+00> : vector<2x16xf32>
    %43 = tpu.matmul %42, %2, %cst_12 {dimension_numbers = #tpu.dot_dimension_numbers<[1], [0], [0], [1], [0, 0, 1, 1], [], []>} : vector<2x16xf32>, vector<16x16xf32>, vector<2x16xf32> -> vector<2x16xf32>
    %44 = arith.addf %43, %38 : vector<2x16xf32>
    %45 = math.tanh %44 : vector<2x16xf32>
    %cst_13 = arith.constant dense<0.000000e+00> : vector<2x16xf32>
    %46 = tpu.matmul %45, %3, %cst_13 {dimension_numbers = #tpu.dot_dimension_numbers<[1], [0], [0], [1], [0, 0, 1, 1], [], []>} : vector<2x16xf32>, vector<16x16xf32>, vector<2x16xf32> -> vector<2x16xf32>
    %47 = arith.addf %46, %8 : vector<2x16xf32>
    %48 = vector.extract_strided_slice %16 {offsets = [6, 0], sizes = [2, 16], strides = [1, 1]} : vector<16x16xf32> to vector<2x16xf32>
    %cst_14 = arith.constant dense<0.000000e+00> : vector<2x16xf32>
    %49 = tpu.matmul %42, %1, %cst_14 {dimension_numbers = #tpu.dot_dimension_numbers<[1], [0], [0], [1], [0, 0, 1, 1], [], []>} : vector<2x16xf32>, vector<16x16xf32>, vector<2x16xf32> -> vector<2x16xf32>
    %50 = arith.addf %48, %49 : vector<2x16xf32>
    %51 = math.tanh %50 : vector<2x16xf32>
    %cst_15 = arith.constant dense<0.000000e+00> : vector<2x16xf32>
    %52 = tpu.matmul %51, %2, %cst_15 {dimension_numbers = #tpu.dot_dimension_numbers<[1], [0], [0], [1], [0, 0, 1, 1], [], []>} : vector<2x16xf32>, vector<16x16xf32>, vector<2x16xf32> -> vector<2x16xf32>
    %53 = arith.addf %52, %47 : vector<2x16xf32>
    %54 = math.tanh %53 : vector<2x16xf32>
    %cst_16 = arith.constant dense<0.000000e+00> : vector<2x16xf32>
    %55 = tpu.matmul %54, %3, %cst_16 {dimension_numbers = #tpu.dot_dimension_numbers<[1], [0], [0], [1], [0, 0, 1, 1], [], []>} : vector<2x16xf32>, vector<16x16xf32>, vector<2x16xf32> -> vector<2x16xf32>
    %56 = arith.addf %55, %8 : vector<2x16xf32>
    %57 = vector.extract_strided_slice %16 {offsets = [8, 0], sizes = [2, 16], strides = [1, 1]} : vector<16x16xf32> to vector<2x16xf32>
    %cst_17 = arith.constant dense<0.000000e+00> : vector<2x16xf32>
    %58 = tpu.matmul %51, %1, %cst_17 {dimension_numbers = #tpu.dot_dimension_numbers<[1], [0], [0], [1], [0, 0, 1, 1], [], []>} : vector<2x16xf32>, vector<16x16xf32>, vector<2x16xf32> -> vector<2x16xf32>
    %59 = arith.addf %57, %58 : vector<2x16xf32>
    %60 = math.tanh %59 : vector<2x16xf32>
    %cst_18 = arith.constant dense<0.000000e+00> : vector<2x16xf32>
    %61 = tpu.matmul %60, %2, %cst_18 {dimension_numbers = #tpu.dot_dimension_numbers<[1], [0], [0], [1], [0, 0, 1, 1], [], []>} : vector<2x16xf32>, vector<16x16xf32>, vector<2x16xf32> -> vector<2x16xf32>
    %62 = arith.addf %61, %56 : vector<2x16xf32>
    %63 = math.tanh %62 : vector<2x16xf32>
    %cst_19 = arith.constant dense<0.000000e+00> : vector<2x16xf32>
    %64 = tpu.matmul %63, %3, %cst_19 {dimension_numbers = #tpu.dot_dimension_numbers<[1], [0], [0], [1], [0, 0, 1, 1], [], []>} : vector<2x16xf32>, vector<16x16xf32>, vector<2x16xf32> -> vector<2x16xf32>
    %65 = arith.addf %64, %8 : vector<2x16xf32>
    %66 = vector.extract_strided_slice %16 {offsets = [10, 0], sizes = [2, 16], strides = [1, 1]} : vector<16x16xf32> to vector<2x16xf32>
    %cst_20 = arith.constant dense<0.000000e+00> : vector<2x16xf32>
    %67 = tpu.matmul %60, %1, %cst_20 {dimension_numbers = #tpu.dot_dimension_numbers<[1], [0], [0], [1], [0, 0, 1, 1], [], []>} : vector<2x16xf32>, vector<16x16xf32>, vector<2x16xf32> -> vector<2x16xf32>
    %68 = arith.addf %66, %67 : vector<2x16xf32>
    %69 = math.tanh %68 : vector<2x16xf32>
    %cst_21 = arith.constant dense<0.000000e+00> : vector<2x16xf32>
    %70 = tpu.matmul %69, %2, %cst_21 {dimension_numbers = #tpu.dot_dimension_numbers<[1], [0], [0], [1], [0, 0, 1, 1], [], []>} : vector<2x16xf32>, vector<16x16xf32>, vector<2x16xf32> -> vector<2x16xf32>
    %71 = arith.addf %70, %65 : vector<2x16xf32>
    %72 = math.tanh %71 : vector<2x16xf32>
    %cst_22 = arith.constant dense<0.000000e+00> : vector<2x16xf32>
    %73 = tpu.matmul %72, %3, %cst_22 {dimension_numbers = #tpu.dot_dimension_numbers<[1], [0], [0], [1], [0, 0, 1, 1], [], []>} : vector<2x16xf32>, vector<16x16xf32>, vector<2x16xf32> -> vector<2x16xf32>
    %74 = arith.addf %73, %8 : vector<2x16xf32>
    %75 = vector.extract_strided_slice %16 {offsets = [12, 0], sizes = [2, 16], strides = [1, 1]} : vector<16x16xf32> to vector<2x16xf32>
    %cst_23 = arith.constant dense<0.000000e+00> : vector<2x16xf32>
    %76 = tpu.matmul %69, %1, %cst_23 {dimension_numbers = #tpu.dot_dimension_numbers<[1], [0], [0], [1], [0, 0, 1, 1], [], []>} : vector<2x16xf32>, vector<16x16xf32>, vector<2x16xf32> -> vector<2x16xf32>
    %77 = arith.addf %75, %76 : vector<2x16xf32>
    %78 = math.tanh %77 : vector<2x16xf32>
    %cst_24 = arith.constant dense<0.000000e+00> : vector<2x16xf32>
    %79 = tpu.matmul %78, %2, %cst_24 {dimension_numbers = #tpu.dot_dimension_numbers<[1], [0], [0], [1], [0, 0, 1, 1], [], []>} : vector<2x16xf32>, vector<16x16xf32>, vector<2x16xf32> -> vector<2x16xf32>
    %80 = arith.addf %79, %74 : vector<2x16xf32>
    %81 = math.tanh %80 : vector<2x16xf32>
    %cst_25 = arith.constant dense<0.000000e+00> : vector<2x16xf32>
    %82 = tpu.matmul %81, %3, %cst_25 {dimension_numbers = #tpu.dot_dimension_numbers<[1], [0], [0], [1], [0, 0, 1, 1], [], []>} : vector<2x16xf32>, vector<16x16xf32>, vector<2x16xf32> -> vector<2x16xf32>
    %83 = arith.addf %82, %8 : vector<2x16xf32>
    %84 = vector.extract_strided_slice %16 {offsets = [14, 0], sizes = [2, 16], strides = [1, 1]} : vector<16x16xf32> to vector<2x16xf32>
    %cst_26 = arith.constant dense<0.000000e+00> : vector<2x16xf32>
    %85 = tpu.matmul %78, %1, %cst_26 {dimension_numbers = #tpu.dot_dimension_numbers<[1], [0], [0], [1], [0, 0, 1, 1], [], []>} : vector<2x16xf32>, vector<16x16xf32>, vector<2x16xf32> -> vector<2x16xf32>
    %86 = arith.addf %84, %85 : vector<2x16xf32>
    %87 = math.tanh %86 : vector<2x16xf32>
    %cst_27 = arith.constant dense<0.000000e+00> : vector<2x16xf32>
    %88 = tpu.matmul %87, %2, %cst_27 {dimension_numbers = #tpu.dot_dimension_numbers<[1], [0], [0], [1], [0, 0, 1, 1], [], []>} : vector<2x16xf32>, vector<16x16xf32>, vector<2x16xf32> -> vector<2x16xf32>
    %89 = arith.addf %88, %83 : vector<2x16xf32>
    %90 = math.tanh %89 : vector<2x16xf32>
    %91 = vector.broadcast %9 : vector<1x16xf32> to vector<2x16xf32>
    %92 = arith.mulf %90, %91 : vector<2x16xf32>
    %cst_28 = arith.constant dense<0.000000e+00> : vector<2xf32>
    %93 = vector.multi_reduction <add>, %92, %cst_28 [1] : vector<2x16xf32> to vector<2xf32>
    %94 = vector.shape_cast %93 : vector<2xf32> to vector<2x1xf32>
    %95 = vector.broadcast %10 : vector<1x1xf32> to vector<2x1xf32>
    %96 = arith.addf %94, %95 : vector<2x1xf32>
    %c0_29 = arith.constant 0 : index
    %c0_30 = arith.constant 0 : index
    %97 = vector.load %arg2[%c0_29, %c0_30] : memref<2x1xf32, #tpu.memory_space<vmem>>, vector<2x1xf32>
    tpu.vector_store %arg2[%c0_29, %c0_30], %96 {strides = array<i32>} : memref<2x1xf32, #tpu.memory_space<vmem>>, vector<2x1xf32>,
    return
  }
}

</mosaic_0001>

<llo_original>
// kernel: tpu_custom_call.1
$region0: #{tpu_custom_call.1}
  #allocation0 [shape = 'u32[]', space=smem, size = 0x4, offset = 0x4, fixed_abs, tag = 'smem constant byte address 0x4 - core index']
  #allocation1 [shape = 'u32[72,128]{1,0:T(1,128)}', space=vmem, size = 0x9000, scoped, tag = 'internal scratch']
  %s0 = inlined_call_operand.vmem [shape: f32[16,1], index: 0, kind: input, shape index: {}]
  %s1 = inlined_call_operand.vmem [shape: f32[53,16], index: 1, kind: input, shape index: {}]
  %s2 = inlined_call_operand.vmem [shape: f32[2,1], index: 2, kind: output, shape index: {}]
  %s3 = sld [smem:[#allocation0]]
  $region18: #{tpu_custom_call.1} parent=0
    _
  %s5 = ssub.s32 1, %s3
  %s6 = scalar_select 0, %s5, %s3
  // Predicated region
  $region2: #{tpu_custom_call.1} parent=0 // pred_check
    _
  $region3: #{tpu_custom_call.1} parent=0 // pred_check_branch
    %8 = sbr.rel (0) target = $region5
  $region4: #{tpu_custom_call.1} parent=0 // pred_region
    _
  $region5: #{tpu_custom_call.1} parent=0 // pred_fallthru
    _
  // Predicated region
  $region6: #{tpu_custom_call.1} parent=0 // pred_check
    _
  $region7: #{tpu_custom_call.1} parent=0 // pred_check_branch
    %10 = sbr.rel (0) target = $region9
  $region8: #{tpu_custom_call.1} parent=0 // pred_region
    _
  $region9: #{tpu_custom_call.1} parent=0 // pred_fallthru
    _
  %v11 = vld [vmem:[%s1] sm:$0xff]
  %v12 = vld [vmem:[%s1 + $0x8] sm:$0xff]
  %v13 = vld [vmem:[%s1 + $0x10] sm:$0xff]
  %v14 = vld [vmem:[%s1 + $0x18] sm:$0xff]
  %v15 = vld [vmem:[%s1 + $0x20] sm:$0xff]
  %v16 = vld [vmem:[%s1 + $0x28] sm:$0xff]
  %v17 = vld [vmem:[%s1 + $0x30] sm:$0x1f]
  %v18 = vperm.slane %v17, 2
  %v19 = vld [vmem:[%s0] sm:$0xff]
  %v20 = vld [vmem:[%s0 + $0x8] sm:$0xff]
  %22 = vset.pattern.permute.xlu0 0
  %23 = vperm.xlu0 %22, %v19
  %v24 = vpop.permute.xlu0 %23
  %27 = vset.pattern.permute.xlu0 0
  %28 = vperm.xlu0 %27, %v20
  %v29 = vpop.permute.xlu0 %28
  %v31 = vperm.slane %v17, 0
  %v32 = vmul.f32 %v24, %v31
  %v33 = vmul.f32 %v29, %v31
  %v34 = vperm.slane %v17, 1
  %v35 = vadd.f32 %v32, %v34
  %v36 = vadd.f32 %v33, %v34
  %vm37 = vcmask 130048
  %v39 = vsel %vm37, 0.0, 0
  %41 = vmatpush.msra.mxu0 0.0
  %42 = vmatpush.msra.mxu0 0.0
  %43 = vmatpush.msra.mxu0 0.0
  %44 = vmatpush.msra.mxu0 0.0
  %45 = vmatpush.msra.mxu0 0.0
  %46 = vmatpush.msra.mxu0 0.0
  %47 = vmatpush.msra.mxu0 0.0
  %48 = vmatpush.msra.mxu0 0.0
  %49 = vmatpush.msra.mxu0 0.0
  %50 = vmatpush.msra.mxu0 0.0
  %51 = vmatpush.msra.mxu0 0.0
  %52 = vmatpush.msra.mxu0 0.0
  %53 = vmatpush.msra.mxu0 0.0
  %54 = vmatpush.msra.mxu0 0.0
  %55 = vmatpush.msra.mxu0 %v16
  %56 = vmatpush.msra.mxu0 %v15
  %57 = vmatmul.f32.gmra.mxu0 %v39
  %v58 = vpop.f32.mrf.mxu0
  %v59 = vadd.f32 %v18, %v58
  %60 = vdwg.mxu0
  %61 = vmatpush.msra.mxu0 0.0
  %62 = vmatpush.msra.mxu0 0.0
  %63 = vmatpush.msra.mxu0 0.0
  %64 = vmatpush.msra.mxu0 0.0
  %65 = vmatpush.msra.mxu0 0.0
  %66 = vmatpush.msra.mxu0 0.0
  %67 = vmatpush.msra.mxu0 0.0
  %68 = vmatpush.msra.mxu0 0.0
  %69 = vmatpush.msra.mxu0 0.0
  %70 = vmatpush.msra.mxu0 0.0
  %71 = vmatpush.msra.mxu0 0.0
  %72 = vmatpush.msra.mxu0 0.0
  %73 = vmatpush.msra.mxu0 0.0
  %74 = vmatpush.msra.mxu0 0.0
  %75 = vmatpush.msra.mxu0 %v12
  %76 = vmatpush.msra.mxu0 %v11
  %77 = vmatmul.f32.gmra.mxu0 %v39
  %v78 = vpop.f32.mrf.mxu0
  %v79 = vadd.f32 0.0, %v78
  %80 = vdwg.mxu0
  %v81 = vadd.f32 %v35, %v79
  %v82 = vtanh.pop %v81
  %v84 = vsel %vm37, %v82, 0
  %86 = vmatpush.msra.mxu0 0.0
  %87 = vmatpush.msra.mxu0 0.0
  %88 = vmatpush.msra.mxu0 0.0
  %89 = vmatpush.msra.mxu0 0.0
  %90 = vmatpush.msra.mxu0 0.0
  %91 = vmatpush.msra.mxu0 0.0
  %92 = vmatpush.msra.mxu0 0.0
  %93 = vmatpush.msra.mxu0 0.0
  %94 = vmatpush.msra.mxu0 0.0
  %95 = vmatpush.msra.mxu0 0.0
  %96 = vmatpush.msra.mxu0 0.0
  %97 = vmatpush.msra.mxu0 0.0
  %98 = vmatpush.msra.mxu0 0.0
  %99 = vmatpush.msra.mxu0 0.0
  %100 = vmatpush.msra.mxu0 %v14
  %101 = vmatpush.msra.mxu0 %v13
  %102 = vmatmul.f32.gmra.mxu0 %v84
  %v103 = vpop.f32.mrf.mxu0
  %v104 = vadd.f32 %v59, %v103
  %105 = vdwg.mxu0
  %v106 = vtanh.pop %v104
  %v108 = vsel %vm37, %v106, 0
  %110 = vmatpush.msra.mxu0 0.0
  %111 = vmatpush.msra.mxu0 0.0
  %112 = vmatpush.msra.mxu0 0.0
  %113 = vmatpush.msra.mxu0 0.0
  %114 = vmatpush.msra.mxu0 0.0
  %115 = vmatpush.msra.mxu0 0.0
  %116 = vmatpush.msra.mxu0 0.0
  %117 = vmatpush.msra.mxu0 0.0
  %118 = vmatpush.msra.mxu0 0.0
  %119 = vmatpush.msra.mxu0 0.0
  %120 = vmatpush.msra.mxu0 0.0
  %121 = vmatpush.msra.mxu0 0.0
  %122 = vmatpush.msra.mxu0 0.0
  %123 = vmatpush.msra.mxu0 0.0
  %124 = vmatpush.msra.mxu0 %v16
  %125 = vmatpush.msra.mxu0 %v15
  %126 = vmatmul.f32.gmra.mxu0 %v108
  %v127 = vpop.f32.mrf.mxu0
  %v128 = vadd.f32 %v18, %v127
  %129 = vdwg.mxu0
  %130 = vmatpush.msra.mxu0 0.0
  %131 = vmatpush.msra.mxu0 0.0
  %132 = vmatpush.msra.mxu0 0.0
  %133 = vmatpush.msra.mxu0 0.0
  %134 = vmatpush.msra.mxu0 0.0
  %135 = vmatpush.msra.mxu0 0.0
  %136 = vmatpush.msra.mxu0 0.0
  %137 = vmatpush.msra.mxu0 0.0
  %138 = vmatpush.msra.mxu0 0.0
  %139 = vmatpush.msra.mxu0 0.0
  %140 = vmatpush.msra.mxu0 0.0
  %141 = vmatpush.msra.mxu0 0.0
  %142 = vmatpush.msra.mxu0 0.0
  %143 = vmatpush.msra.mxu0 0.0
  %144 = vmatpush.msra.mxu0 %v12
  %145 = vmatpush.msra.mxu0 %v11
  %146 = vmatmul.f32.gmra.mxu0 %v84
  %v147 = vpop.f32.mrf.mxu0
  %v148 = vadd.f32 0.0, %v147
  %149 = vdwg.mxu0
  %v151 = vrot.slane %v148, 6
  %v153 = vadd.f32 %v35, %v151
  %v154 = vtanh.pop %v153
  %v156 = vrot.slane %v154, 2
  %v157 = vsel %vm37, %v156, 0
  %159 = vmatpush.msra.mxu0 0.0
  %160 = vmatpush.msra.mxu0 0.0
  %161 = vmatpush.msra.mxu0 0.0
  %162 = vmatpush.msra.mxu0 0.0
  %163 = vmatpush.msra.mxu0 0.0
  %164 = vmatpush.msra.mxu0 0.0
  %165 = vmatpush.msra.mxu0 0.0
  %166 = vmatpush.msra.mxu0 0.0
  %167 = vmatpush.msra.mxu0 0.0
  %168 = vmatpush.msra.mxu0 0.0
  %169 = vmatpush.msra.mxu0 0.0
  %170 = vmatpush.msra.mxu0 0.0
  %171 = vmatpush.msra.mxu0 0.0
  %172 = vmatpush.msra.mxu0 0.0
  %173 = vmatpush.msra.mxu0 %v14
  %174 = vmatpush.msra.mxu0 %v13
  %175 = vmatmul.f32.gmra.mxu0 %v157
  %v176 = vpop.f32.mrf.mxu0
  %v177 = vadd.f32 %v128, %v176
  %178 = vdwg.mxu0
  %v179 = vtanh.pop %v177
  %v181 = vsel %vm37, %v179, 0
  %183 = vmatpush.msra.mxu0 0.0
  %184 = vmatpush.msra.mxu0 0.0
  %185 = vmatpush.msra.mxu0 0.0
  %186 = vmatpush.msra.mxu0 0.0
  %187 = vmatpush.msra.mxu0 0.0
  %188 = vmatpush.msra.mxu0 0.0
  %189 = vmatpush.msra.mxu0 0.0
  %190 = vmatpush.msra.mxu0 0.0
  %191 = vmatpush.msra.mxu0 0.0
  %192 = vmatpush.msra.mxu0 0.0
  %193 = vmatpush.msra.mxu0 0.0
  %194 = vmatpush.msra.mxu0 0.0
  %195 = vmatpush.msra.mxu0 0.0
  %196 = vmatpush.msra.mxu0 0.0
  %197 = vmatpush.msra.mxu0 %v16
  %198 = vmatpush.msra.mxu0 %v15
  %199 = vmatmul.f32.gmra.mxu0 %v181
  %v200 = vpop.f32.mrf.mxu0
  %v201 = vadd.f32 %v18, %v200
  %202 = vdwg.mxu0
  %203 = vmatpush.msra.mxu0 0.0
  %204 = vmatpush.msra.mxu0 0.0
  %205 = vmatpush.msra.mxu0 0.0
  %206 = vmatpush.msra.mxu0 0.0
  %207 = vmatpush.msra.mxu0 0.0
  %208 = vmatpush.msra.mxu0 0.0
  %209 = vmatpush.msra.mxu0 0.0
  %210 = vmatpush.msra.mxu0 0.0
  %211 = vmatpush.msra.mxu0 0.0
  %212 = vmatpush.msra.mxu0 0.0
  %213 = vmatpush.msra.mxu0 0.0
  %214 = vmatpush.msra.mxu0 0.0
  %215 = vmatpush.msra.mxu0 0.0
  %216 = vmatpush.msra.mxu0 0.0
  %217 = vmatpush.msra.mxu0 %v12
  %218 = vmatpush.msra.mxu0 %v11
  %219 = vmatmul.f32.gmra.mxu0 %v157
  %v220 = vpop.f32.mrf.mxu0
  %v221 = vadd.f32 0.0, %v220
  %222 = vdwg.mxu0
  %v224 = vrot.slane %v221, 4
  %v226 = vadd.f32 %v35, %v224
  %v227 = vtanh.pop %v226
  %v229 = vrot.slane %v227, 4
  %v230 = vsel %vm37, %v229, 0
  %232 = vmatpush.msra.mxu0 0.0
  %233 = vmatpush.msra.mxu0 0.0
  %234 = vmatpush.msra.mxu0 0.0
  %235 = vmatpush.msra.mxu0 0.0
  %236 = vmatpush.msra.mxu0 0.0
  %237 = vmatpush.msra.mxu0 0.0
  %238 = vmatpush.msra.mxu0 0.0
  %239 = vmatpush.msra.mxu0 0.0
  %240 = vmatpush.msra.mxu0 0.0
  %241 = vmatpush.msra.mxu0 0.0
  %242 = vmatpush.msra.mxu0 0.0
  %243 = vmatpush.msra.mxu0 0.0
  %244 = vmatpush.msra.mxu0 0.0
  %245 = vmatpush.msra.mxu0 0.0
  %246 = vmatpush.msra.mxu0 %v14
  %247 = vmatpush.msra.mxu0 %v13
  %248 = vmatmul.f32.gmra.mxu0 %v230
  %v249 = vpop.f32.mrf.mxu0
  %v250 = vadd.f32 %v201, %v249
  %251 = vdwg.mxu0
  %v252 = vtanh.pop %v250
  %v254 = vsel %vm37, %v252, 0
  %256 = vmatpush.msra.mxu0 0.0
  %257 = vmatpush.msra.mxu0 0.0
  %258 = vmatpush.msra.mxu0 0.0
  %259 = vmatpush.msra.mxu0 0.0
  %260 = vmatpush.msra.mxu0 0.0
  %261 = vmatpush.msra.mxu0 0.0
  %262 = vmatpush.msra.mxu0 0.0
  %263 = vmatpush.msra.mxu0 0.0
  %264 = vmatpush.msra.mxu0 0.0
  %265 = vmatpush.msra.mxu0 0.0
  %266 = vmatpush.msra.mxu0 0.0
  %267 = vmatpush.msra.mxu0 0.0
  %268 = vmatpush.msra.mxu0 0.0
  %269 = vmatpush.msra.mxu0 0.0
  %270 = vmatpush.msra.mxu0 %v16
  %271 = vmatpush.msra.mxu0 %v15
  %272 = vmatmul.f32.gmra.mxu0 %v254
  %v273 = vpop.f32.mrf.mxu0
  %v274 = vadd.f32 %v18, %v273
  %275 = vdwg.mxu0
  %276 = vmatpush.msra.mxu0 0.0
  %277 = vmatpush.msra.mxu0 0.0
  %278 = vmatpush.msra.mxu0 0.0
  %279 = vmatpush.msra.mxu0 0.0
  %280 = vmatpush.msra.mxu0 0.0
  %281 = vmatpush.msra.mxu0 0.0
  %282 = vmatpush.msra.mxu0 0.0
  %283 = vmatpush.msra.mxu0 0.0
  %284 = vmatpush.msra.mxu0 0.0
  %285 = vmatpush.msra.mxu0 0.0
  %286 = vmatpush.msra.mxu0 0.0
  %287 = vmatpush.msra.mxu0 0.0
  %288 = vmatpush.msra.mxu0 0.0
  %289 = vmatpush.msra.mxu0 0.0
  %290 = vmatpush.msra.mxu0 %v12
  %291 = vmatpush.msra.mxu0 %v11
  %292 = vmatmul.f32.gmra.mxu0 %v230
  %v293 = vpop.f32.mrf.mxu0
  %v294 = vadd.f32 0.0, %v293
  %295 = vdwg.mxu0
  %v297 = vrot.slane %v294, 2
  %v299 = vadd.f32 %v35, %v297
  %v300 = vtanh.pop %v299
  %v302 = vrot.slane %v300, 6
  %v303 = vsel %vm37, %v302, 0
  %305 = vmatpush.msra.mxu0 0.0
  %306 = vmatpush.msra.mxu0 0.0
  %307 = vmatpush.msra.mxu0 0.0
  %308 = vmatpush.msra.mxu0 0.0
  %309 = vmatpush.msra.mxu0 0.0
  %310 = vmatpush.msra.mxu0 0.0
  %311 = vmatpush.msra.mxu0 0.0
  %312 = vmatpush.msra.mxu0 0.0
  %313 = vmatpush.msra.mxu0 0.0
  %314 = vmatpush.msra.mxu0 0.0
  %315 = vmatpush.msra.mxu0 0.0
  %316 = vmatpush.msra.mxu0 0.0
  %317 = vmatpush.msra.mxu0 0.0
  %318 = vmatpush.msra.mxu0 0.0
  %319 = vmatpush.msra.mxu0 %v14
  %320 = vmatpush.msra.mxu0 %v13
  %321 = vmatmul.f32.gmra.mxu0 %v303
  %v322 = vpop.f32.mrf.mxu0
  %v323 = vadd.f32 %v274, %v322
  %324 = vdwg.mxu0
  %v325 = vtanh.pop %v323
  %v327 = vsel %vm37, %v325, 0
  %329 = vmatpush.msra.mxu0 0.0
  %330 = vmatpush.msra.mxu0 0.0
  %331 = vmatpush.msra.mxu0 0.0
  %332 = vmatpush.msra.mxu0 0.0
  %333 = vmatpush.msra.mxu0 0.0
  %334 = vmatpush.msra.mxu0 0.0
  %335 = vmatpush.msra.mxu0 0.0
  %336 = vmatpush.msra.mxu0 0.0
  %337 = vmatpush.msra.mxu0 0.0
  %338 = vmatpush.msra.mxu0 0.0
  %339 = vmatpush.msra.mxu0 0.0
  %340 = vmatpush.msra.mxu0 0.0
  %341 = vmatpush.msra.mxu0 0.0
  %342 = vmatpush.msra.mxu0 0.0
  %343 = vmatpush.msra.mxu0 %v16
  %344 = vmatpush.msra.mxu0 %v15
  %345 = vmatmul.f32.gmra.mxu0 %v327
  %v346 = vpop.f32.mrf.mxu0
  %v347 = vadd.f32 %v18, %v346
  %348 = vdwg.mxu0
  %349 = vmatpush.msra.mxu0 0.0
  %350 = vmatpush.msra.mxu0 0.0
  %351 = vmatpush.msra.mxu0 0.0
  %352 = vmatpush.msra.mxu0 0.0
  %353 = vmatpush.msra.mxu0 0.0
  %354 = vmatpush.msra.mxu0 0.0
  %355 = vmatpush.msra.mxu0 0.0
  %356 = vmatpush.msra.mxu0 0.0
  %357 = vmatpush.msra.mxu0 0.0
  %358 = vmatpush.msra.mxu0 0.0
  %359 = vmatpush.msra.mxu0 0.0
  %360 = vmatpush.msra.mxu0 0.0
  %361 = vmatpush.msra.mxu0 0.0
  %362 = vmatpush.msra.mxu0 0.0
  %363 = vmatpush.msra.mxu0 %v12
  %364 = vmatpush.msra.mxu0 %v11
  %365 = vmatmul.f32.gmra.mxu0 %v303
  %v366 = vpop.f32.mrf.mxu0
  %v367 = vadd.f32 0.0, %v366
  %368 = vdwg.mxu0
  %v369 = vadd.f32 %v36, %v367
  %v370 = vtanh.pop %v369
  %v372 = vsel %vm37, %v370, 0
  %374 = vmatpush.msra.mxu0 0.0
  %375 = vmatpush.msra.mxu0 0.0
  %376 = vmatpush.msra.mxu0 0.0
  %377 = vmatpush.msra.mxu0 0.0
  %378 = vmatpush.msra.mxu0 0.0
  %379 = vmatpush.msra.mxu0 0.0
  %380 = vmatpush.msra.mxu0 0.0
  %381 = vmatpush.msra.mxu0 0.0
  %382 = vmatpush.msra.mxu0 0.0
  %383 = vmatpush.msra.mxu0 0.0
  %384 = vmatpush.msra.mxu0 0.0
  %385 = vmatpush.msra.mxu0 0.0
  %386 = vmatpush.msra.mxu0 0.0
  %387 = vmatpush.msra.mxu0 0.0
  %388 = vmatpush.msra.mxu0 %v14
  %389 = vmatpush.msra.mxu0 %v13
  %390 = vmatmul.f32.gmra.mxu0 %v372
  %v391 = vpop.f32.mrf.mxu0
  %v392 = vadd.f32 %v347, %v391
  %393 = vdwg.mxu0
  %v394 = vtanh.pop %v392
  %v396 = vsel %vm37, %v394, 0
  %398 = vmatpush.msra.mxu0 0.0
  %399 = vmatpush.msra.mxu0 0.0
  %400 = vmatpush.msra.mxu0 0.0
  %401 = vmatpush.msra.mxu0 0.0
  %402 = vmatpush.msra.mxu0 0.0
  %403 = vmatpush.msra.mxu0 0.0
  %404 = vmatpush.msra.mxu0 0.0
  %405 = vmatpush.msra.mxu0 0.0
  %406 = vmatpush.msra.mxu0 0.0
  %407 = vmatpush.msra.mxu0 0.0
  %408 = vmatpush.msra.mxu0 0.0
  %409 = vmatpush.msra.mxu0 0.0
  %410 = vmatpush.msra.mxu0 0.0
  %411 = vmatpush.msra.mxu0 0.0
  %412 = vmatpush.msra.mxu0 %v16
  %413 = vmatpush.msra.mxu0 %v15
  %414 = vmatmul.f32.gmra.mxu0 %v396
  %v415 = vpop.f32.mrf.mxu0
  %v416 = vadd.f32 %v18, %v415
  %417 = vdwg.mxu0
  %418 = vmatpush.msra.mxu0 0.0
  %419 = vmatpush.msra.mxu0 0.0
  %420 = vmatpush.msra.mxu0 0.0
  %421 = vmatpush.msra.mxu0 0.0
  %422 = vmatpush.msra.mxu0 0.0
  %423 = vmatpush.msra.mxu0 0.0
  %424 = vmatpush.msra.mxu0 0.0
  %425 = vmatpush.msra.mxu0 0.0
  %426 = vmatpush.msra.mxu0 0.0
  %427 = vmatpush.msra.mxu0 0.0
  %428 = vmatpush.msra.mxu0 0.0
  %429 = vmatpush.msra.mxu0 0.0
  %430 = vmatpush.msra.mxu0 0.0
  %431 = vmatpush.msra.mxu0 0.0
  %432 = vmatpush.msra.mxu0 %v12
  %433 = vmatpush.msra.mxu0 %v11
  %434 = vmatmul.f32.gmra.mxu0 %v372
  %v435 = vpop.f32.mrf.mxu0
  %v436 = vadd.f32 0.0, %v435
  %437 = vdwg.mxu0
  %v439 = vrot.slane %v436, 6
  %v441 = vadd.f32 %v36, %v439
  %v442 = vtanh.pop %v441
  %v444 = vrot.slane %v442, 2
  %v445 = vsel %vm37, %v444, 0
  %447 = vmatpush.msra.mxu0 0.0
  %448 = vmatpush.msra.mxu0 0.0
  %449 = vmatpush.msra.mxu0 0.0
  %450 = vmatpush.msra.mxu0 0.0
  %451 = vmatpush.msra.mxu0 0.0
  %452 = vmatpush.msra.mxu0 0.0
  %453 = vmatpush.msra.mxu0 0.0
  %454 = vmatpush.msra.mxu0 0.0
  %455 = vmatpush.msra.mxu0 0.0
  %456 = vmatpush.msra.mxu0 0.0
  %457 = vmatpush.msra.mxu0 0.0
  %458 = vmatpush.msra.mxu0 0.0
  %459 = vmatpush.msra.mxu0 0.0
  %460 = vmatpush.msra.mxu0 0.0
  %461 = vmatpush.msra.mxu0 %v14
  %462 = vmatpush.msra.mxu0 %v13
  %463 = vmatmul.f32.gmra.mxu0 %v445
  %v464 = vpop.f32.mrf.mxu0
  %v465 = vadd.f32 %v416, %v464
  %466 = vdwg.mxu0
  %v467 = vtanh.pop %v465
  %v469 = vsel %vm37, %v467, 0
  %471 = vmatpush.msra.mxu0 0.0
  %472 = vmatpush.msra.mxu0 0.0
  %473 = vmatpush.msra.mxu0 0.0
  %474 = vmatpush.msra.mxu0 0.0
  %475 = vmatpush.msra.mxu0 0.0
  %476 = vmatpush.msra.mxu0 0.0
  %477 = vmatpush.msra.mxu0 0.0
  %478 = vmatpush.msra.mxu0 0.0
  %479 = vmatpush.msra.mxu0 0.0
  %480 = vmatpush.msra.mxu0 0.0
  %481 = vmatpush.msra.mxu0 0.0
  %482 = vmatpush.msra.mxu0 0.0
  %483 = vmatpush.msra.mxu0 0.0
  %484 = vmatpush.msra.mxu0 0.0
  %485 = vmatpush.msra.mxu0 %v16
  %486 = vmatpush.msra.mxu0 %v15
  %487 = vmatmul.f32.gmra.mxu0 %v469
  %v488 = vpop.f32.mrf.mxu0
  %v489 = vadd.f32 %v18, %v488
  %490 = vdwg.mxu0
  %491 = vmatpush.msra.mxu0 0.0
  %492 = vmatpush.msra.mxu0 0.0
  %493 = vmatpush.msra.mxu0 0.0
  %494 = vmatpush.msra.mxu0 0.0
  %495 = vmatpush.msra.mxu0 0.0
  %496 = vmatpush.msra.mxu0 0.0
  %497 = vmatpush.msra.mxu0 0.0
  %498 = vmatpush.msra.mxu0 0.0
  %499 = vmatpush.msra.mxu0 0.0
  %500 = vmatpush.msra.mxu0 0.0
  %501 = vmatpush.msra.mxu0 0.0
  %502 = vmatpush.msra.mxu0 0.0
  %503 = vmatpush.msra.mxu0 0.0
  %504 = vmatpush.msra.mxu0 0.0
  %505 = vmatpush.msra.mxu0 %v12
  %506 = vmatpush.msra.mxu0 %v11
  %507 = vmatmul.f32.gmra.mxu0 %v445
  %v508 = vpop.f32.mrf.mxu0
  %v509 = vadd.f32 0.0, %v508
  %510 = vdwg.mxu0
  %v512 = vrot.slane %v509, 4
  %v514 = vadd.f32 %v36, %v512
  %v515 = vtanh.pop %v514
  %v517 = vrot.slane %v515, 4
  %v518 = vsel %vm37, %v517, 0
  %520 = vmatpush.msra.mxu0 0.0
  %521 = vmatpush.msra.mxu0 0.0
  %522 = vmatpush.msra.mxu0 0.0
  %523 = vmatpush.msra.mxu0 0.0
  %524 = vmatpush.msra.mxu0 0.0
  %525 = vmatpush.msra.mxu0 0.0
  %526 = vmatpush.msra.mxu0 0.0
  %527 = vmatpush.msra.mxu0 0.0
  %528 = vmatpush.msra.mxu0 0.0
  %529 = vmatpush.msra.mxu0 0.0
  %530 = vmatpush.msra.mxu0 0.0
  %531 = vmatpush.msra.mxu0 0.0
  %532 = vmatpush.msra.mxu0 0.0
  %533 = vmatpush.msra.mxu0 0.0
  %534 = vmatpush.msra.mxu0 %v14
  %535 = vmatpush.msra.mxu0 %v13
  %536 = vmatmul.f32.gmra.mxu0 %v518
  %v537 = vpop.f32.mrf.mxu0
  %v538 = vadd.f32 %v489, %v537
  %539 = vdwg.mxu0
  %v540 = vtanh.pop %v538
  %v542 = vsel %vm37, %v540, 0
  %544 = vmatpush.msra.mxu0 0.0
  %545 = vmatpush.msra.mxu0 0.0
  %546 = vmatpush.msra.mxu0 0.0
  %547 = vmatpush.msra.mxu0 0.0
  %548 = vmatpush.msra.mxu0 0.0
  %549 = vmatpush.msra.mxu0 0.0
  %550 = vmatpush.msra.mxu0 0.0
  %551 = vmatpush.msra.mxu0 0.0
  %552 = vmatpush.msra.mxu0 0.0
  %553 = vmatpush.msra.mxu0 0.0
  %554 = vmatpush.msra.mxu0 0.0
  %555 = vmatpush.msra.mxu0 0.0
  %556 = vmatpush.msra.mxu0 0.0
  %557 = vmatpush.msra.mxu0 0.0
  %558 = vmatpush.msra.mxu0 %v16
  %559 = vmatpush.msra.mxu0 %v15
  %560 = vmatmul.f32.gmra.mxu0 %v542
  %v561 = vpop.f32.mrf.mxu0
  %v562 = vadd.f32 %v18, %v561
  %563 = vdwg.mxu0
  %564 = vmatpush.msra.mxu0 0.0
  %565 = vmatpush.msra.mxu0 0.0
  %566 = vmatpush.msra.mxu0 0.0
  %567 = vmatpush.msra.mxu0 0.0
  %568 = vmatpush.msra.mxu0 0.0
  %569 = vmatpush.msra.mxu0 0.0
  %570 = vmatpush.msra.mxu0 0.0
  %571 = vmatpush.msra.mxu0 0.0
  %572 = vmatpush.msra.mxu0 0.0
  %573 = vmatpush.msra.mxu0 0.0
  %574 = vmatpush.msra.mxu0 0.0
  %575 = vmatpush.msra.mxu0 0.0
  %576 = vmatpush.msra.mxu0 0.0
  %577 = vmatpush.msra.mxu0 0.0
  %578 = vmatpush.msra.mxu0 %v12
  %579 = vmatpush.msra.mxu0 %v11
  %580 = vmatmul.f32.gmra.mxu0 %v518
  %v581 = vpop.f32.mrf.mxu0
  %v582 = vadd.f32 0.0, %v581
  %583 = vdwg.mxu0
  %v585 = vrot.slane %v582, 2
  %v587 = vadd.f32 %v36, %v585
  %v588 = vtanh.pop %v587
  %v590 = vrot.slane %v588, 6
  %v591 = vsel %vm37, %v590, 0
  %593 = vmatpush.msra.mxu0 0.0
  %594 = vmatpush.msra.mxu0 0.0
  %595 = vmatpush.msra.mxu0 0.0
  %596 = vmatpush.msra.mxu0 0.0
  %597 = vmatpush.msra.mxu0 0.0
  %598 = vmatpush.msra.mxu0 0.0
  %599 = vmatpush.msra.mxu0 0.0
  %600 = vmatpush.msra.mxu0 0.0
  %601 = vmatpush.msra.mxu0 0.0
  %602 = vmatpush.msra.mxu0 0.0
  %603 = vmatpush.msra.mxu0 0.0
  %604 = vmatpush.msra.mxu0 0.0
  %605 = vmatpush.msra.mxu0 0.0
  %606 = vmatpush.msra.mxu0 0.0
  %607 = vmatpush.msra.mxu0 %v14
  %608 = vmatpush.msra.mxu0 %v13
  %609 = vmatmul.f32.gmra.mxu0 %v591
  %v610 = vpop.f32.mrf.mxu0
  %v611 = vadd.f32 %v562, %v610
  %612 = vdwg.mxu0
  %v613 = vtanh.pop %v611
  %v614 = vperm.slane %v17, 3
  %v615 = vmul.f32 %v613, %v614
  %vm616 = vcmask 123904
  %v617 = vsel %vm616, %v615, 0.0
  %618 = vadd.xlane.f32.xlu0 %v617
  %v619 = vpop.xlane.xlu0 %618
  %v620 = vperm.slane %v17, 4
  %v621 = vadd.f32 %v619, %v620
  %vm622 = vcmask 1024
  %623 = vst.msk [vmem:[%s2] sm:$0x3] %vm622, %v621
  // Predicated region
  $region10: #{tpu_custom_call.1} parent=0 // pred_check
    _
  $region11: #{tpu_custom_call.1} parent=0 // pred_check_branch
    %625 = sbr.rel (0) target = $region13
  $region12: #{tpu_custom_call.1} parent=0 // pred_region
    _
  $region13: #{tpu_custom_call.1} parent=0 // pred_fallthru
    _
  // Predicated region
  $region14: #{tpu_custom_call.1} parent=0 // pred_check
    _
  $region15: #{tpu_custom_call.1} parent=0 // pred_check_branch
    %627 = sbr.rel (0) target = $region17
  $region16: #{tpu_custom_call.1} parent=0 // pred_region
    _
  $region17: #{tpu_custom_call.1} parent=0 // pred_fallthru
    _

</llo_original>
